<compile_context>
chip_gen: v5e
topology: v5e:2x2
jax: 0.10.0
libtpu: 0.0.40
codegen_flags: <defaults>
</compile_context>

<pallas_src>
import functools

import jax
import jax.numpy as jnp
from jax import lax
from jax.experimental import pallas as pl
from jax.experimental.pallas import tpu as pltpu

IGNORE_INDEX = -100
_NEG_FILL = -1e30  # softmax-neutral fill for out-of-vocab lanes


def _mlm_loss_kernel(logits_ref, labels_ref, out_ref,
                     m_scr, s_scr, t_scr, *,
                     n_rows: int, n_vocab: int, tn: int, tv: int,
                     ignore_index: int):
    i = pl.program_id(0)       # row block   (parallel)
    kv = pl.program_id(1)      # vocab chunk (arbitrary / sequential)
    nkv = pl.num_programs(1)

    @pl.when(kv == 0)
    def _():
        m_scr[...] = jnp.full_like(m_scr, _NEG_FILL)   # running max
        s_scr[...] = jnp.zeros_like(s_scr)             # running sum-exp
        t_scr[...] = jnp.zeros_like(t_scr)             # gathered target logit

    x = logits_ref[...].astype(jnp.float32)            # (TN, TV) bounded chunk
    lbl = labels_ref[...]                               # (TN, 1) int32

    # global vocab index of each lane in this chunk; (1, TV) broadcasts
    col = kv * tv + lax.broadcasted_iota(jnp.int32, (1, tv), 1)
    if n_vocab % tv != 0:                               # static: lane mask only if needed
        x = jnp.where(col < n_vocab, x, _NEG_FILL)

    # --- online (streaming) logsumexp over vocab chunks ---
    m_prev = m_scr[...]
    m_new = jnp.maximum(m_prev, jnp.max(x, axis=1, keepdims=True))
    alpha = jnp.exp(m_prev - m_new)
    s_scr[...] = alpha * s_scr[...] + jnp.sum(jnp.exp(x - m_new),
                                              axis=1, keepdims=True)
    m_scr[...] = m_new

    # --- gather logits[r, labels[r]] if the label falls in this chunk ---
    hit = col == lbl                                    # (TN, TV) via broadcast
    t_scr[...] += jnp.sum(jnp.where(hit, x, 0.0), axis=1, keepdims=True)

    @pl.when(kv == nkv - 1)
    def _():
        valid = lbl != ignore_index                     # (TN, 1)
        if n_rows % tn != 0:                            # static: row mask only if needed
            row = i * tn + lax.broadcasted_iota(jnp.int32, (tn, 1), 0)
            valid = valid & (row < n_rows)
        lse = m_scr[...] + jnp.log(s_scr[...])
        out_ref[...] = jnp.where(valid, lse - t_scr[...], 0.0)


def mlm_loss(logits: jax.Array, labels: jax.Array, *,
             ignore_index: int = IGNORE_INDEX,
             max_block_rows: int = 512,
             max_block_vocab: int = 2048) -> jax.Array:
    """logits: (..., V) float, labels: (...,) int -> scalar f32 CE (mean)."""
    V = logits.shape[-1]
    logits2 = logits.reshape(-1, V)
    labels1 = labels.reshape(-1).astype(jnp.int32)
    N = logits2.shape[0]

    # Vocab chunk: full V when small (no padding / masking needed), else a
    # lane-dense multiple of 128 so VMEM stays bounded for huge vocabularies.
    TV = V if V <= max_block_vocab else max_block_vocab
    nkv = (V + TV - 1) // TV

    # Row block sized from the *actual* logits itemsize, ~2 MiB native slab
    # (double-buffered by the pipeline), rounded to a sublane multiple of 8.
    itemsize = jnp.dtype(logits2.dtype).itemsize
    slab_bytes = 2 * 1024 * 1024
    rows_fit = max(8, (slab_bytes // (TV * itemsize)) // 8 * 8)
    n_ceil8 = ((N + 7) // 8) * 8
    TN = max(8, min(max_block_rows, rows_fit, n_ceil8))
    nb = (N + TN - 1) // TN

    labels_col = labels1.reshape(N, 1)

    kernel = functools.partial(
        _mlm_loss_kernel, n_rows=N, n_vocab=V, tn=TN, tv=TV,
        ignore_index=ignore_index)

    per_row = pl.pallas_call(
        kernel,
        out_shape=jax.ShapeDtypeStruct((N, 1), jnp.float32),
        grid=(nb, nkv),
        in_specs=[
            pl.BlockSpec((TN, TV), lambda i, kv: (i, kv)),   # logits chunk
            pl.BlockSpec((TN, 1), lambda i, kv: (i, 0)),     # label column
        ],
        out_specs=pl.BlockSpec((TN, 1), lambda i, kv: (i, 0)),
        scratch_shapes=[
            pltpu.VMEM((TN, 1), jnp.float32),   # running max
            pltpu.VMEM((TN, 1), jnp.float32),   # running sum-exp
            pltpu.VMEM((TN, 1), jnp.float32),   # running target logit
        ],
        compiler_params=pltpu.CompilerParams(
            dimension_semantics=("parallel", "arbitrary"),
            vmem_limit_bytes=32 * 1024 * 1024),
    )(logits2, labels_col)

    # Tiny final reduction in JAX (also what enables the parallel row axis).
    valid = labels1 != ignore_index
    total = per_row[:, 0].sum()
    cnt = valid.sum().astype(jnp.float32)
    return total / cnt


def _reference(logits, labels, ignore_index=IGNORE_INDEX):
    x = logits.reshape(-1, logits.shape[-1]).astype(jnp.float32)
    lbl = labels.reshape(-1)
    valid = lbl != ignore_index
    safe = jnp.where(valid, lbl, 0)
    lse = jax.nn.logsumexp(x, axis=-1)
    tgt = jnp.take_along_axis(x, safe[:, None], axis=-1)[:, 0]
    per = jnp.where(valid, lse - tgt, 0.0)
    return per.sum() / valid.sum().astype(jnp.float32)


if __name__ == "__main__":
    key = jax.random.PRNGKey(0)
    k_logits, k_labels = jax.random.split(key)

    B, S, V = 2, 8, 32
    logits = jax.random.normal(k_logits, (B, S, V), dtype=jnp.float32)
    labels = jax.random.randint(k_labels, (B, S), 0, V, dtype=jnp.int32)
    # mask a few positions to exercise ignore_index
    labels = labels.at[0, :3].set(IGNORE_INDEX)
    labels = labels.at[1, 5].set(IGNORE_INDEX)

    loss = mlm_loss(logits, labels)
    jax.block_until_ready(loss)

    ref = _reference(logits, labels)
    assert jnp.allclose(loss, ref, rtol=1e-5, atol=1e-5), (loss, ref)
    print("KERNEL_OK")
</pallas_src>

<mosaic_0001>
module attributes {stable_mosaic.version = 11 : i64} {
  func.func @_mlm_loss_kernel(%arg0: i32, %arg1: i32, %arg2: memref<16x32xf32, #tpu.memory_space<vmem>>, %arg3: memref<16x1xi32, #tpu.memory_space<vmem>>, %arg4: memref<16x1xf32, #tpu.memory_space<vmem>>, %arg5: memref<16x1xf32, #tpu.memory_space<vmem>>, %arg6: memref<16x1xf32, #tpu.memory_space<vmem>>, %arg7: memref<16x1xf32, #tpu.memory_space<vmem>>) attributes {dimension_semantics = [#tpu.dimension_semantics<parallel>, #tpu.dimension_semantics<arbitrary>], iteration_bounds = array<i64: 1, 1>, scalar_prefetch = 0 : i64, scratch_operands = 3 : i64, tpu.core_type = #tpu.core_type<tc>, window_params = [{transform_indices = @transform_0, window_bounds = array<i64: 16, 32>}, {transform_indices = @transform_1, window_bounds = array<i64: 16, 1>}, {transform_indices = @transform_2, window_bounds = array<i64: 16, 1>}]} {
    %c0_i32 = arith.constant 0 : i32
    %0 = arith.cmpi eq, %arg1, %c0_i32 : i32
    %1 = arith.extui %0 : i1 to i32
    %c0_i32_0 = arith.constant 0 : i32
    %2 = arith.cmpi ne, %1, %c0_i32_0 : i32
    scf.if %2 {
      %cst_21 = arith.constant -1.000000e+30 : f32
      %38 = vector.broadcast %cst_21 : f32 to vector<16x1xf32>
      %c0_22 = arith.constant 0 : index
      %c0_23 = arith.constant 0 : index
      %39 = vector.load %arg5[%c0_22, %c0_23] : memref<16x1xf32, #tpu.memory_space<vmem>>, vector<16x1xf32>
      tpu.vector_store %arg5[%c0_22, %c0_23], %38 {strides = array<i32>} : memref<16x1xf32, #tpu.memory_space<vmem>>, vector<16x1xf32>,
      %cst_24 = arith.constant 0.000000e+00 : f32
      %40 = vector.broadcast %cst_24 : f32 to vector<16x1xf32>
      %c0_25 = arith.constant 0 : index
      %c0_26 = arith.constant 0 : index
      %41 = vector.load %arg6[%c0_25, %c0_26] : memref<16x1xf32, #tpu.memory_space<vmem>>, vector<16x1xf32>
      tpu.vector_store %arg6[%c0_25, %c0_26], %40 {strides = array<i32>} : memref<16x1xf32, #tpu.memory_space<vmem>>, vector<16x1xf32>,
      %cst_27 = arith.constant 0.000000e+00 : f32
      %42 = vector.broadcast %cst_27 : f32 to vector<16x1xf32>
      %c0_28 = arith.constant 0 : index
      %c0_29 = arith.constant 0 : index
      %43 = vector.load %arg7[%c0_28, %c0_29] : memref<16x1xf32, #tpu.memory_space<vmem>>, vector<16x1xf32>
      tpu.vector_store %arg7[%c0_28, %c0_29], %42 {strides = array<i32>} : memref<16x1xf32, #tpu.memory_space<vmem>>, vector<16x1xf32>,
    } else {
    }
    %c0 = arith.constant 0 : index
    %c0_1 = arith.constant 0 : index
    %3 = vector.load %arg2[%c0, %c0_1] : memref<16x32xf32, #tpu.memory_space<vmem>>, vector<16x32xf32>
    %c0_2 = arith.constant 0 : index
    %c0_3 = arith.constant 0 : index
    %4 = vector.load %arg3[%c0_2, %c0_3] : memref<16x1xi32, #tpu.memory_space<vmem>>, vector<16x1xi32>
    %c32_i32 = arith.constant 32 : i32
    %5 = arith.muli %arg1, %c32_i32 : i32
    %6 = tpu.iota {dimensions = array<i32: 1>} : vector<1x32xi32>
    %7 = vector.broadcast %5 : i32 to vector<1x32xi32>
    %8 = arith.addi %7, %6 : vector<1x32xi32>
    %c0_4 = arith.constant 0 : index
    %c0_5 = arith.constant 0 : index
    %9 = vector.load %arg5[%c0_4, %c0_5] : memref<16x1xf32, #tpu.memory_space<vmem>>, vector<16x1xf32>
    %cst = arith.constant dense<0xFF800000> : vector<16xf32>
    %10 = vector.multi_reduction <maximumf>, %3, %cst [1] : vector<16x32xf32> to vector<16xf32>
    %11 = vector.shape_cast %10 : vector<16xf32> to vector<16x1xf32>
    %12 = arith.maximumf %9, %11 : vector<16x1xf32>
    %13 = arith.subf %9, %12 : vector<16x1xf32>
    %14 = math.exp %13 : vector<16x1xf32>
    %c0_6 = arith.constant 0 : index
    %c0_7 = arith.constant 0 : index
    %15 = vector.load %arg6[%c0_6, %c0_7] : memref<16x1xf32, #tpu.memory_space<vmem>>, vector<16x1xf32>
    %16 = arith.mulf %14, %15 : vector<16x1xf32>
    %17 = vector.broadcast %12 : vector<16x1xf32> to vector<16x32xf32>
    %18 = arith.subf %3, %17 : vector<16x32xf32>
    %19 = math.exp %18 : vector<16x32xf32>
    %cst_8 = arith.constant dense<0.000000e+00> : vector<16xf32>
    %20 = vector.multi_reduction <add>, %19, %cst_8 [1] : vector<16x32xf32> to vector<16xf32>
    %21 = vector.shape_cast %20 : vector<16xf32> to vector<16x1xf32>
    %22 = arith.addf %16, %21 : vector<16x1xf32>
    %c0_9 = arith.constant 0 : index
    %c0_10 = arith.constant 0 : index
    %23 = vector.load %arg6[%c0_9, %c0_10] : memref<16x1xf32, #tpu.memory_space<vmem>>, vector<16x1xf32>
    tpu.vector_store %arg6[%c0_9, %c0_10], %22 {strides = array<i32>} : memref<16x1xf32, #tpu.memory_space<vmem>>, vector<16x1xf32>,
    %c0_11 = arith.constant 0 : index
    %c0_12 = arith.constant 0 : index
    %24 = vector.load %arg5[%c0_11, %c0_12] : memref<16x1xf32, #tpu.memory_space<vmem>>, vector<16x1xf32>
    tpu.vector_store %arg5[%c0_11, %c0_12], %12 {strides = array<i32>} : memref<16x1xf32, #tpu.memory_space<vmem>>, vector<16x1xf32>,
    %25 = vector.broadcast %8 : vector<1x32xi32> to vector<16x32xi32>
    %26 = vector.broadcast %4 : vector<16x1xi32> to vector<16x32xi32>
    %27 = arith.cmpi eq, %25, %26 : vector<16x32xi32>
    %c0_13 = arith.constant 0 : index
    %c0_14 = arith.constant 0 : index
    %28 = vector.load %arg7[%c0_13, %c0_14] : memref<16x1xf32, #tpu.memory_space<vmem>>, vector<16x1xf32>
    %cst_15 = arith.constant 0.000000e+00 : f32
    %29 = vector.broadcast %cst_15 : f32 to vector<16x32xf32>
    %30 = arith.select %27, %3, %29 : vector<16x32xi1>, vector<16x32xf32>
    %cst_16 = arith.constant dense<0.000000e+00> : vector<16xf32>
    %31 = vector.multi_reduction <add>, %30, %cst_16 [1] : vector<16x32xf32> to vector<16xf32>
    %32 = vector.shape_cast %31 : vector<16xf32> to vector<16x1xf32>
    %33 = arith.addf %28, %32 : vector<16x1xf32>
    %c0_17 = arith.constant 0 : index
    %c0_18 = arith.constant 0 : index
    %34 = vector.load %arg7[%c0_17, %c0_18] : memref<16x1xf32, #tpu.memory_space<vmem>>, vector<16x1xf32>
    tpu.vector_store %arg7[%c0_17, %c0_18], %33 {strides = array<i32>} : memref<16x1xf32, #tpu.memory_space<vmem>>, vector<16x1xf32>,
    %c0_i32_19 = arith.constant 0 : i32
    %35 = arith.cmpi eq, %arg1, %c0_i32_19 : i32
    %36 = arith.extui %35 : i1 to i32
    %c0_i32_20 = arith.constant 0 : i32
    %37 = arith.cmpi ne, %36, %c0_i32_20 : i32
    scf.if %37 {
      %c-100_i32 = arith.constant -100 : i32
      %38 = vector.broadcast %c-100_i32 : i32 to vector<16x1xi32>
      %39 = arith.cmpi ne, %4, %38 : vector<16x1xi32>
      %c0_21 = arith.constant 0 : index
      %c0_22 = arith.constant 0 : index
      %40 = vector.load %arg5[%c0_21, %c0_22] : memref<16x1xf32, #tpu.memory_space<vmem>>, vector<16x1xf32>
      %c0_23 = arith.constant 0 : index
      %c0_24 = arith.constant 0 : index
      %41 = vector.load %arg6[%c0_23, %c0_24] : memref<16x1xf32, #tpu.memory_space<vmem>>, vector<16x1xf32>
      %42 = math.log %41 : vector<16x1xf32>
      %43 = arith.addf %40, %42 : vector<16x1xf32>
      %c0_25 = arith.constant 0 : index
      %c0_26 = arith.constant 0 : index
      %44 = vector.load %arg7[%c0_25, %c0_26] : memref<16x1xf32, #tpu.memory_space<vmem>>, vector<16x1xf32>
      %45 = arith.subf %43, %44 : vector<16x1xf32>
      %cst_27 = arith.constant 0.000000e+00 : f32
      %46 = vector.broadcast %cst_27 : f32 to vector<16x1xf32>
      %47 = arith.select %39, %45, %46 : vector<16x1xi1>, vector<16x1xf32>
      %c0_28 = arith.constant 0 : index
      %c0_29 = arith.constant 0 : index
      %48 = vector.load %arg4[%c0_28, %c0_29] : memref<16x1xf32, #tpu.memory_space<vmem>>, vector<16x1xf32>
      tpu.vector_store %arg4[%c0_28, %c0_29], %47 {strides = array<i32>} : memref<16x1xf32, #tpu.memory_space<vmem>>, vector<16x1xf32>,
    } else {
    }
    return
  }
  func.func @transform_0(%arg0: i32, %arg1: i32) -> (i32, i32) {
    %c0_i32 = arith.constant 0 : i32
    return %arg0, %arg1 : i32, i32
  }
  func.func @transform_1(%arg0: i32, %arg1: i32) -> (i32, i32) {
    %c0_i32 = arith.constant 0 : i32
    %c0_i32_0 = arith.constant 0 : i32
    return %arg0, %c0_i32 : i32, i32
  }
  func.func @transform_2(%arg0: i32, %arg1: i32) -> (i32, i32) {
    %c0_i32 = arith.constant 0 : i32
    %c0_i32_0 = arith.constant 0 : i32
    return %arg0, %c0_i32 : i32, i32
  }
}

</mosaic_0001>

<llo_original>
// kernel: tpu_custom_call.1
$region0: #{tpu_custom_call.1}
  #allocation0 [shape = 'u32[]', space=smem, size = 0x4, offset = 0x4, fixed_abs, tag = 'smem constant byte address 0x4 - core index']
  #allocation1 [shape = 'u32[72,128]{1,0:T(1,128)}', space=vmem, size = 0x9000, scoped, tag = 'internal scratch']
  #allocation2 [shape = 'f32[16,1]{1,0:T(8,128)}', space=vmem, size = 0x2000, scoped, tag = 'scratch operand']
  #allocation3 [shape = 'f32[16,1]{1,0:T(8,128)}', space=vmem, size = 0x2000, scoped, tag = 'scratch operand']
  #allocation4 [shape = 'f32[16,1]{1,0:T(8,128)}', space=vmem, size = 0x2000, scoped, tag = 'scratch operand']
  %s0 = inlined_call_operand.vmem [shape: f32[16,32], index: 0, kind: input, shape index: {}]
  %s1 = inlined_call_operand.vmem [shape: s32[16,1], index: 1, kind: input, shape index: {}]
  %s2 = inlined_call_operand.vmem [shape: f32[16,1], index: 2, kind: output, shape index: {}]
  %s3 = sld [smem:[#allocation0]]
  $region26: #{tpu_custom_call.1} parent=0
    _
  %s5 = ssub.s32 1, %s3
  %s6 = scalar_select 0, %s5, %s3
  // Predicated region
  $region2: #{tpu_custom_call.1} parent=0 // pred_check
    _
  $region3: #{tpu_custom_call.1} parent=0 // pred_check_branch
    %8 = sbr.rel (0) target = $region5
  $region4: #{tpu_custom_call.1} parent=0 // pred_region
    _
  $region5: #{tpu_custom_call.1} parent=0 // pred_fallthru
    _
  // Predicated region
  $region6: #{tpu_custom_call.1} parent=0 // pred_check
    _
  $region7: #{tpu_custom_call.1} parent=0 // pred_check_branch
    %10 = sbr.rel (0) target = $region9
  $region8: #{tpu_custom_call.1} parent=0 // pred_region
    _
  $region9: #{tpu_custom_call.1} parent=0 // pred_fallthru
    _
  %p11 = scmp.eq.s32.totalorder 0, 0
  // Predicated region
  $region10: #{tpu_custom_call.1} parent=0 // pred_check
    %p12 = pneg %p11
  $region11: #{tpu_custom_call.1} parent=0 // pred_check_branch
    %14 = sbr.rel (%p12) target = $region13
  $region12: #{tpu_custom_call.1} parent=0 // pred_region
    %vm15 = vcmask 7168
    %16 = vst.msk [vmem:[#allocation2] sm:$0xff] %vm15, -1e+30
    %17 = vst.msk [vmem:[#allocation2 + $0x8] sm:$0xff] %vm15, -1e+30
    %18 = vst.msk [vmem:[#allocation3] sm:$0xff] %vm15, 0.0
    %19 = vst.msk [vmem:[#allocation3 + $0x8] sm:$0xff] %vm15, 0.0
    %20 = vst.msk [vmem:[#allocation4] sm:$0xff] %vm15, 0.0
    %21 = vst.msk [vmem:[#allocation4 + $0x8] sm:$0xff] %vm15, 0.0
  $region13: #{tpu_custom_call.1} parent=0 // pred_fallthru
    _
  %v22 = vld [vmem:[%s0] sm:$0xff]
  %v23 = vld [vmem:[%s0 + $0x8] sm:$0xff]
  %v24 = vld [vmem:[%s1] sm:$0xff]
  %v25 = vld [vmem:[%s1 + $0x8] sm:$0xff]
  %s26 = smul.u32 0, 32
  %v27 = vlaneseq
  %v28 = vand.u32 %v27, 127
  %v29 = vstv %s26
  %v30 = vadd.s32 %v29, %v28
  %v31 = vld [vmem:[#allocation2] sm:$0xff]
  %v32 = vld [vmem:[#allocation2 + $0x8] sm:$0xff]
  %vm33 = vcmask 261120
  %v34 = vsel %vm33, %v22, -inf
  %35 = vmax.xlane.f32.xlu0 %v34
  %v36 = vpop.xlane.xlu0 %35
  %v37 = vsel %vm33, %v23, -inf
  %38 = vmax.xlane.f32.xlu0 %v37
  %v39 = vpop.xlane.xlu0 %38
  %v40 = vmax.f32 %v31, %v36
  %v41 = vmax.f32 %v32, %v39
  %v42 = vsub.f32 %v31, %v40
  %v43 = vsub.f32 %v32, %v41
  %v44 = vmul.f32 %v42, 1.442695
  %v45 = vpow.pop %v44
  %v46 = vmul.f32 %v43, 1.442695
  %v47 = vpow.pop %v46
  %v48 = vld [vmem:[#allocation3] sm:$0xff]
  %v49 = vld [vmem:[#allocation3 + $0x8] sm:$0xff]
  %v50 = vmul.f32 %v45, %v48
  %v51 = vmul.f32 %v47, %v49
  %53 = vset.pattern.permute.xlu0 0
  %54 = vperm.xlu0 %53, %v40
  %v55 = vpop.permute.xlu0 %54
  %58 = vset.pattern.permute.xlu0 0
  %59 = vperm.xlu0 %58, %v41
  %v60 = vpop.permute.xlu0 %59
  %v62 = vsub.f32 %v22, %v55
  %v63 = vsub.f32 %v23, %v60
  %v64 = vmul.f32 %v62, 1.442695
  %v65 = vpow.pop %v64
  %v66 = vmul.f32 %v63, 1.442695
  %v67 = vpow.pop %v66
  %v68 = vsel %vm33, %v65, 0.0
  %69 = vadd.xlane.f32.xlu0 %v68
  %v70 = vpop.xlane.xlu0 %69
  %v71 = vsel %vm33, %v67, 0.0
  %72 = vadd.xlane.f32.xlu0 %v71
  %v73 = vpop.xlane.xlu0 %72
  %v74 = vadd.f32 %v50, %v70
  %v75 = vadd.f32 %v51, %v73
  %vm76 = vcmask 7168
  %77 = vst.msk [vmem:[#allocation3] sm:$0xff] %vm76, %v74
  %78 = vst.msk [vmem:[#allocation3 + $0x8] sm:$0xff] %vm76, %v75
  %79 = vst.msk [vmem:[#allocation2] sm:$0xff] %vm76, %v40
  %80 = vst.msk [vmem:[#allocation2 + $0x8] sm:$0xff] %vm76, %v41
  %81 = vset.pattern.permute.xlu0 0
  %82 = vperm.xlu0 %81, %v24
  %v83 = vpop.permute.xlu0 %82
  %84 = vset.pattern.permute.xlu0 0
  %85 = vperm.xlu0 %84, %v25
  %v86 = vpop.permute.xlu0 %85
  %vm87 = vcmp.eq.s32.totalorder %v30, %v83
  %vm88 = vcmp.eq.s32.totalorder %v30, %v86
  %v89 = vld [vmem:[#allocation4] sm:$0xff]
  %v90 = vld [vmem:[#allocation4 + $0x8] sm:$0xff]
  %v91 = vsel %vm87, %v22, 0.0
  %v92 = vsel %vm88, %v23, 0.0
  %v93 = vsel %vm33, %v91, 0.0
  %94 = vadd.xlane.f32.xlu0 %v93
  %v95 = vpop.xlane.xlu0 %94
  %v96 = vsel %vm33, %v92, 0.0
  %97 = vadd.xlane.f32.xlu0 %v96
  %v98 = vpop.xlane.xlu0 %97
  %v99 = vadd.f32 %v89, %v95
  %v100 = vadd.f32 %v90, %v98
  %101 = vst.msk [vmem:[#allocation4] sm:$0xff] %vm76, %v99
  %102 = vst.msk [vmem:[#allocation4 + $0x8] sm:$0xff] %vm76, %v100
  // Predicated region
  $region14: #{tpu_custom_call.1} parent=0 // pred_check
    %p103 = pneg %p11
  $region15: #{tpu_custom_call.1} parent=0 // pred_check_branch
    %105 = sbr.rel (%p103) target = $region17
  $region16: #{tpu_custom_call.1} parent=0 // pred_region
    %vm106 = vcmp.ne.s32.totalorder %v24, 4294967196
    %vm107 = vcmp.ne.s32.totalorder %v25, 4294967196
    %v108 = vld [vmem:[#allocation2] sm:$0xff]
    %v109 = vld [vmem:[#allocation2 + $0x8] sm:$0xff]
    %v110 = vld [vmem:[#allocation3] sm:$0xff]
    %v111 = vld [vmem:[#allocation3 + $0x8] sm:$0xff]
    %v112 = vlog2.pop %v110
    %v113 = vmul.f32 %v112, 0.6931472
    %v114 = vlog2.pop %v111
    %v115 = vmul.f32 %v114, 0.6931472
    %v116 = vadd.f32 %v108, %v113
    %v117 = vadd.f32 %v109, %v115
    %v118 = vld [vmem:[#allocation4] sm:$0xff]
    %v119 = vld [vmem:[#allocation4 + $0x8] sm:$0xff]
    %v120 = vsub.f32 %v116, %v118
    %v121 = vsub.f32 %v117, %v119
    %v122 = vsel %vm106, %v120, 0.0
    %v123 = vsel %vm107, %v121, 0.0
    %124 = vst.msk [vmem:[%s2] sm:$0xff] %vm76, %v122
    %125 = vst.msk [vmem:[%s2 + $0x8] sm:$0xff] %vm76, %v123
  $region17: #{tpu_custom_call.1} parent=0 // pred_fallthru
    _
  // Predicated region
  $region18: #{tpu_custom_call.1} parent=0 // pred_check
    _
  $region19: #{tpu_custom_call.1} parent=0 // pred_check_branch
    %127 = sbr.rel (0) target = $region21
  $region20: #{tpu_custom_call.1} parent=0 // pred_region
    _
  $region21: #{tpu_custom_call.1} parent=0 // pred_fallthru
    _
  // Predicated region
  $region22: #{tpu_custom_call.1} parent=0 // pred_check
    _
  $region23: #{tpu_custom_call.1} parent=0 // pred_check_branch
    %129 = sbr.rel (0) target = $region25
  $region24: #{tpu_custom_call.1} parent=0 // pred_region
    _
  $region25: #{tpu_custom_call.1} parent=0 // pred_fallthru
    _

</llo_original>
